<compile_context>
chip_gen: v7x
topology: tpu7x:2x2x1
jax: 0.10.0
libtpu: 0.0.40
codegen_flags: <defaults>
</compile_context>

<pallas_src>
import math

import jax
import jax.numpy as jnp
from jax.experimental import pallas as pl
from jax.experimental.pallas import tpu as pltpu


def fixed_embedding_kernel(idx_ref, w_ref, o_ref):
    """One grid step: gather `tile_rows * G` embeddings via a one-hot MXU matmul."""
    idx = idx_ref[...]                              # (tile_rows, G) int32, in [0, c_in)
    tile_rows, pack = idx.shape
    gcin = w_ref.shape[0]                           # G * c_in
    c_in = gcin // pack

    # Build the (tile_rows, G*c_in) one-hot for the block-diagonal packed table:
    # row r is hot at columns g*c_in + idx[r, g] for g = 0..G-1.
    cols = jax.lax.broadcasted_iota(jnp.int32, (tile_rows, gcin), 1)
    hot = None
    for g in range(pack):                           # pack (=G) is small & static
        eq = (idx[:, g:g + 1] + g * c_in) == cols
        hot = eq if hot is None else jnp.logical_or(hot, eq)
    onehot = hot.astype(w_ref.dtype)

    # one_hot @ kron(I_G, table) == concat_g table[idx[:, g]]  (exact row selection)
    o_ref[...] = jnp.dot(onehot, w_ref[...],
                         preferred_element_type=jnp.float32).astype(o_ref.dtype)


def make_fixed_embedding_table(c_in, d_model, dtype=jnp.float32):
    """Fixed sin/cos table, identical to FixedEmbedding.__init__ (d_model must be even)."""
    assert d_model % 2 == 0, "FixedEmbedding requires an even d_model"
    position = jnp.arange(c_in, dtype=jnp.float32)[:, None]                  # (c_in, 1)
    div_term = jnp.exp(jnp.arange(0, d_model, 2, dtype=jnp.float32)
                       * -(math.log(10000.0) / d_model))                     # (d_model/2,)
    w = jnp.zeros((c_in, d_model), dtype=jnp.float32)
    w = w.at[:, 0::2].set(jnp.sin(position * div_term))
    w = w.at[:, 1::2].set(jnp.cos(position * div_term))
    return w.astype(dtype)       # bf16 table halves HBM writes if downstream allows it


def _round8(n):
    return ((n + 7) // 8) * 8


def fixed_embedding(x_idx, table, *, fallback_below_tokens=0):
    """
    x_idx : integer indices, any shape (...).
    table : (c_in, d_model) fixed embedding table.
    Returns table[x_idx] with shape (..., d_model), dtype = table.dtype.
    Set fallback_below_tokens > 0 to dispatch tiny problems straight to jnp.take.
    """
    orig_shape = x_idx.shape
    c_in, d_model = table.shape
    M = math.prod(orig_shape) if orig_shape else 1
    if M == 0:
        return jnp.zeros((*orig_shape, d_model), table.dtype)
    if M < fallback_below_tokens:        # tiny-M fast path (kernel launch not worth it)
        return jnp.take(table, jnp.clip(x_idx, 0, c_in - 1), axis=0).astype(table.dtype)

    idx_flat = jnp.clip(x_idx.reshape(M).astype(jnp.int32), 0, c_in - 1)

    # ---- token packing for a lane-dense (>=128-wide) output ------------------
    G = max(1, 128 // d_model)                      # tokens packed per output row
    Gd = G * d_model
    n_rows = pl.cdiv(M, G)
    rem = n_rows * G - M
    if rem:                                         # tiny pad (< G tokens) only
        idx_flat = jnp.pad(idx_flat, (0, rem))
    idx2d = idx_flat.reshape(n_rows, G)

    w_pack = jnp.kron(jnp.eye(G, dtype=table.dtype), table) if G > 1 else table
    gcin = G * c_in                                 # packed table rows

    # ---- tile sizing: ~1-2 MiB of output per grid step -----------------------
    itemsize = jnp.dtype(table.dtype).itemsize
    lane_row_bytes = max(Gd, 128) * itemsize
    tile_rows = max(8, (2 << 20) // lane_row_bytes)     # ~2 MiB of output / step
    tile_rows = min(tile_rows, max(8, 8192 // G))       # cap ~8192 tokens / step
    tile_rows = max(8, (tile_rows // 8) * 8)
    if n_rows >= 8:
        tile_rows = min(tile_rows, (n_rows // 8) * 8)   # never exceed the array
        # v7x has 2 TensorCores sharding "parallel" grid axes: prefer >= 2 steps.
        if n_rows >= 16 and pl.cdiv(n_rows, tile_rows) < 2:
            tile_rows = max(8, min(tile_rows, _round8(pl.cdiv(n_rows, 2))))
    else:
        tile_rows = n_rows                              # full-extent block (< 8 rows)

    grid = (pl.cdiv(n_rows, tile_rows),)                # ragged last block is masked

    # ---- VMEM budget (v7x: 64 MiB physical / 32 MiB default scoped) ----------
    out_bytes = 2 * tile_rows * max(Gd, 128) * itemsize        # double-buffered out
    idx_bytes = 2 * tile_rows * 128 * 4                        # lane-padded int32 idx
    tbl_bytes = _round8(gcin) * max(Gd, 128) * itemsize        # single-buffered table
    vmem_limit = int(min(64 << 20, max(4 << 20, 2 * (out_bytes + idx_bytes + tbl_bytes))))

    idx_spec = pl.BlockSpec((tile_rows, G), lambda i: (i, 0))
    out_spec = pl.BlockSpec((tile_rows, Gd), lambda i: (i, 0))

    def call(table_spec):
        return pl.pallas_call(
            fixed_embedding_kernel,
            out_shape=jax.ShapeDtypeStruct((n_rows, Gd), table.dtype),
            grid_spec=pltpu.PrefetchScalarGridSpec(
                num_scalar_prefetch=0,
                grid=grid,
                in_specs=[idx_spec, table_spec],
                out_specs=out_spec,
            ),
            compiler_params=pltpu.CompilerParams(
                dimension_semantics=("parallel",),
                vmem_limit_bytes=vmem_limit,
            ),
            cost_estimate=pl.CostEstimate(
                flops=2 * n_rows * gcin * Gd,
                transcendentals=0,
                bytes_accessed=n_rows * G * 4 + gcin * Gd * itemsize
                + n_rows * Gd * itemsize,
            ),
        )(idx2d, w_pack)

    try:
        # Constant index_map: the table block never changes, so single-buffer it.
        out = call(pl.BlockSpec((gcin, Gd), lambda i: (0, 0),
                                pipeline_mode=pl.Buffered(1)))
    except Exception:
        # Fallback if this jax build rejects pipeline_mode / Buffered(1); the table
        # is tiny, so the extra double-buffer copy is harmless.
        out = call(pl.BlockSpec((gcin, Gd), lambda i: (0, 0)))

    out_flat = out.reshape(n_rows * G, d_model)          # free row-major unpack
    if rem:                                              # only when M % G != 0
        out_flat = out_flat[:M]
    return out_flat.reshape(*orig_shape, d_model)


def fixed_embedding_reference(x_idx, table):
    """Plain-JAX reference matching FixedEmbedding.forward (frozen embedding lookup)."""
    return jnp.take(table, x_idx, axis=0)


if __name__ == "__main__":
    B, L = 2, 16          # batch, sequence of integer "time feature" indices
    c_in, d_model = 24, 32

    key = jax.random.PRNGKey(0)
    x_idx = jax.random.randint(key, (B, L), 0, c_in, dtype=jnp.int32)

    table = make_fixed_embedding_table(c_in, d_model)

    out = fixed_embedding(x_idx, table)
    out = jax.block_until_ready(out)

    ref = fixed_embedding_reference(x_idx, table)
    assert out.shape == (B, L, d_model)
    assert jnp.allclose(out, ref, atol=1e-6, rtol=1e-6), "Pallas kernel mismatch vs reference"
    print("KERNEL_OK")
</pallas_src>

<mosaic_0001>
module attributes {stable_mosaic.version = 11 : i64} {
  func.func @fixed_embedding_kernel(%arg0: i32, %arg1: memref<8x4xi32, #tpu.memory_space<vmem>>, %arg2: memref<96x128xf32, #tpu.memory_space<vmem>>, %arg3: memref<8x128xf32, #tpu.memory_space<vmem>>) attributes {dimension_semantics = [#tpu.dimension_semantics<parallel>], iteration_bounds = array<i64: 1>, scalar_prefetch = 0 : i64, scratch_operands = 0 : i64, tpu.core_type = #tpu.core_type<tc>, window_params = [{transform_indices = @transform_0, window_bounds = array<i64: 8, 4>}, {pipeline_mode = #tpu.pipeline_mode<synchronous>, transform_indices = @transform_1, window_bounds = array<i64: 96, 128>}, {transform_indices = @transform_2, window_bounds = array<i64: 8, 128>}]} {
    %c0 = arith.constant 0 : index
    %c0_0 = arith.constant 0 : index
    %0 = vector.load %arg1[%c0, %c0_0] : memref<8x4xi32, #tpu.memory_space<vmem>>, vector<8x4xi32>
    %1 = tpu.iota {dimensions = array<i32: 1>} : vector<8x96xi32>
    %2 = vector.extract_strided_slice %0 {offsets = [0, 0], sizes = [8, 1], strides = [1, 1]} : vector<8x4xi32> to vector<8x1xi32>
    %c0_i32 = arith.constant 0 : i32
    %3 = vector.broadcast %c0_i32 : i32 to vector<8x1xi32>
    %4 = arith.addi %2, %3 : vector<8x1xi32>
    %5 = vector.broadcast %4 : vector<8x1xi32> to vector<8x96xi32>
    %6 = arith.cmpi eq, %5, %1 : vector<8x96xi32>
    %7 = vector.extract_strided_slice %0 {offsets = [0, 1], sizes = [8, 1], strides = [1, 1]} : vector<8x4xi32> to vector<8x1xi32>
    %c24_i32 = arith.constant 24 : i32
    %8 = vector.broadcast %c24_i32 : i32 to vector<8x1xi32>
    %9 = arith.addi %7, %8 : vector<8x1xi32>
    %10 = vector.broadcast %9 : vector<8x1xi32> to vector<8x96xi32>
    %11 = arith.cmpi eq, %10, %1 : vector<8x96xi32>
    %12 = arith.ori %6, %11 : vector<8x96xi1>
    %13 = vector.extract_strided_slice %0 {offsets = [0, 2], sizes = [8, 1], strides = [1, 1]} : vector<8x4xi32> to vector<8x1xi32>
    %c48_i32 = arith.constant 48 : i32
    %14 = vector.broadcast %c48_i32 : i32 to vector<8x1xi32>
    %15 = arith.addi %13, %14 : vector<8x1xi32>
    %16 = vector.broadcast %15 : vector<8x1xi32> to vector<8x96xi32>
    %17 = arith.cmpi eq, %16, %1 : vector<8x96xi32>
    %18 = arith.ori %12, %17 : vector<8x96xi1>
    %19 = vector.extract_strided_slice %0 {offsets = [0, 3], sizes = [8, 1], strides = [1, 1]} : vector<8x4xi32> to vector<8x1xi32>
    %c72_i32 = arith.constant 72 : i32
    %20 = vector.broadcast %c72_i32 : i32 to vector<8x1xi32>
    %21 = arith.addi %19, %20 : vector<8x1xi32>
    %22 = vector.broadcast %21 : vector<8x1xi32> to vector<8x96xi32>
    %23 = arith.cmpi eq, %22, %1 : vector<8x96xi32>
    %24 = arith.ori %18, %23 : vector<8x96xi1>
    %25 = arith.extui %24 : vector<8x96xi1> to vector<8x96xi32>
    %26 = arith.sitofp %25 : vector<8x96xi32> to vector<8x96xf32>
    %c0_1 = arith.constant 0 : index
    %c0_2 = arith.constant 0 : index
    %27 = vector.load %arg2[%c0_1, %c0_2] : memref<96x128xf32, #tpu.memory_space<vmem>>, vector<96x128xf32>
    %cst = arith.constant dense<0.000000e+00> : vector<8x128xf32>
    %28 = tpu.matmul %26, %27, %cst {dimension_numbers = #tpu.dot_dimension_numbers<[1], [0], [0], [1], [0, 0, 1, 1], [], []>} : vector<8x96xf32>, vector<96x128xf32>, vector<8x128xf32> -> vector<8x128xf32>
    %c0_3 = arith.constant 0 : index
    %c0_4 = arith.constant 0 : index
    %29 = vector.load %arg3[%c0_3, %c0_4] : memref<8x128xf32, #tpu.memory_space<vmem>>, vector<8x128xf32>
    tpu.vector_store %arg3[%c0_3, %c0_4], %28 {strides = array<i32>} : memref<8x128xf32, #tpu.memory_space<vmem>>, vector<8x128xf32>,
    return
  }
  func.func @transform_0(%arg0: i32) -> (i32, i32) {
    %c0_i32 = arith.constant 0 : i32
    %c0_i32_0 = arith.constant 0 : i32
    return %arg0, %c0_i32 : i32, i32
  }
  func.func @transform_1(%arg0: i32) -> (i32, i32) {
    %c0_i32 = arith.constant 0 : i32
    %c0_i32_0 = arith.constant 0 : i32
    %c0_i32_1 = arith.constant 0 : i32
    return %c0_i32, %c0_i32_0 : i32, i32
  }
  func.func @transform_2(%arg0: i32) -> (i32, i32) {
    %c0_i32 = arith.constant 0 : i32
    %c0_i32_0 = arith.constant 0 : i32
    return %arg0, %c0_i32 : i32, i32
  }
}

module attributes {stable_mosaic.version = 11 : i64} {
  func.func @fixed_embedding_kernel(%arg0: i32, %arg1: memref<8x4xi32, #tpu.memory_space<vmem>>, %arg2: memref<96x128xf32, #tpu.memory_space<vmem>>, %arg3: memref<8x128xf32, #tpu.memory_space<vmem>>) attributes {dimension_semantics = [#tpu.dimension_semantics<parallel>], iteration_bounds = array<i64: 1>, scalar_prefetch = 0 : i64, scratch_operands = 0 : i64, tpu.core_type = #tpu.core_type<tc>, window_params = [{transform_indices = @transform_0, window_bounds = array<i64: 8, 4>}, {pipeline_mode = #tpu.pipeline_mode<synchronous>, transform_indices = @transform_1, window_bounds = array<i64: 96, 128>}, {transform_indices = @transform_2, window_bounds = array<i64: 8, 128>}]} {
    %c0 = arith.constant 0 : index
    %c0_0 = arith.constant 0 : index
    %0 = vector.load %arg1[%c0, %c0_0] : memref<8x4xi32, #tpu.memory_space<vmem>>, vector<8x4xi32>
    %1 = tpu.iota {dimensions = array<i32: 1>} : vector<8x96xi32>
    %2 = vector.extract_strided_slice %0 {offsets = [0, 0], sizes = [8, 1], strides = [1, 1]} : vector<8x4xi32> to vector<8x1xi32>
    %c0_i32 = arith.constant 0 : i32
    %3 = vector.broadcast %c0_i32 : i32 to vector<8x1xi32>
    %4 = arith.addi %2, %3 : vector<8x1xi32>
    %5 = vector.broadcast %4 : vector<8x1xi32> to vector<8x96xi32>
    %6 = arith.cmpi eq, %5, %1 : vector<8x96xi32>
    %7 = vector.extract_strided_slice %0 {offsets = [0, 1], sizes = [8, 1], strides = [1, 1]} : vector<8x4xi32> to vector<8x1xi32>
    %c24_i32 = arith.constant 24 : i32
    %8 = vector.broadcast %c24_i32 : i32 to vector<8x1xi32>
    %9 = arith.addi %7, %8 : vector<8x1xi32>
    %10 = vector.broadcast %9 : vector<8x1xi32> to vector<8x96xi32>
    %11 = arith.cmpi eq, %10, %1 : vector<8x96xi32>
    %12 = arith.ori %6, %11 : vector<8x96xi1>
    %13 = vector.extract_strided_slice %0 {offsets = [0, 2], sizes = [8, 1], strides = [1, 1]} : vector<8x4xi32> to vector<8x1xi32>
    %c48_i32 = arith.constant 48 : i32
    %14 = vector.broadcast %c48_i32 : i32 to vector<8x1xi32>
    %15 = arith.addi %13, %14 : vector<8x1xi32>
    %16 = vector.broadcast %15 : vector<8x1xi32> to vector<8x96xi32>
    %17 = arith.cmpi eq, %16, %1 : vector<8x96xi32>
    %18 = arith.ori %12, %17 : vector<8x96xi1>
    %19 = vector.extract_strided_slice %0 {offsets = [0, 3], sizes = [8, 1], strides = [1, 1]} : vector<8x4xi32> to vector<8x1xi32>
    %c72_i32 = arith.constant 72 : i32
    %20 = vector.broadcast %c72_i32 : i32 to vector<8x1xi32>
    %21 = arith.addi %19, %20 : vector<8x1xi32>
    %22 = vector.broadcast %21 : vector<8x1xi32> to vector<8x96xi32>
    %23 = arith.cmpi eq, %22, %1 : vector<8x96xi32>
    %24 = arith.ori %18, %23 : vector<8x96xi1>
    %25 = arith.extui %24 : vector<8x96xi1> to vector<8x96xi32>
    %26 = arith.sitofp %25 : vector<8x96xi32> to vector<8x96xf32>
    %c0_1 = arith.constant 0 : index
    %c0_2 = arith.constant 0 : index
    %27 = vector.load %arg2[%c0_1, %c0_2] : memref<96x128xf32, #tpu.memory_space<vmem>>, vector<96x128xf32>
    %cst = arith.constant dense<0.000000e+00> : vector<8x128xf32>
    %28 = tpu.matmul %26, %27, %cst {dimension_numbers = #tpu.dot_dimension_numbers<[1], [0], [0], [1], [0, 0, 1, 1], [], []>} : vector<8x96xf32>, vector<96x128xf32>, vector<8x128xf32> -> vector<8x128xf32>
    %c0_3 = arith.constant 0 : index
    %c0_4 = arith.constant 0 : index
    %29 = vector.load %arg3[%c0_3, %c0_4] : memref<8x128xf32, #tpu.memory_space<vmem>>, vector<8x128xf32>
    tpu.vector_store %arg3[%c0_3, %c0_4], %28 {strides = array<i32>} : memref<8x128xf32, #tpu.memory_space<vmem>>, vector<8x128xf32>,
    return
  }
  func.func @transform_0(%arg0: i32) -> (i32, i32) {
    %c0_i32 = arith.constant 0 : i32
    %c0_i32_0 = arith.constant 0 : i32
    return %arg0, %c0_i32 : i32, i32
  }
  func.func @transform_1(%arg0: i32) -> (i32, i32) {
    %c0_i32 = arith.constant 0 : i32
    %c0_i32_0 = arith.constant 0 : i32
    %c0_i32_1 = arith.constant 0 : i32
    return %c0_i32, %c0_i32_0 : i32, i32
  }
  func.func @transform_2(%arg0: i32) -> (i32, i32) {
    %c0_i32 = arith.constant 0 : i32
    %c0_i32_0 = arith.constant 0 : i32
    return %arg0, %c0_i32 : i32, i32
  }
}

</mosaic_0001>

<llo_original>
// kernel: tpu_custom_call.1
$region0: #{tpu_custom_call.1}
  #allocation0 [shape = 'u32[]', space=smem, size = 0x4, offset = 0x4, fixed_abs, tag = 'smem constant byte address 0x4 - core index']
  #allocation1 [shape = 'u32[144,128]{1,0:T(1,128)}', space=vmem, size = 0x12000, scoped, tag = 'internal scratch']
  %s0 = inlined_call_operand.vmem [shape: s32[8,4], index: 0, kind: input, shape index: {}]
  %s1 = inlined_call_operand.hbm [shape: f32[96,128], index: 1, kind: input, shape index: {}]
  %s2 = inlined_call_operand.hbm [shape: f32[8,128], index: 2, kind: output, shape index: {}]
  %s3 = sld [smem:[#allocation0]]
  $region22: #{tpu_custom_call.1} parent=0
    _
  %s5 = ssub.s32 1, %s3
  %s6 = scalar_select 0, %s5, %s3
  $region1: #{tpu_custom_call.1} parent=0
    #allocation2 [shape = 'u8[49152]{0}', space=vmem, size = 0xc000, scoped, tag = 'input window, operand 1, single buffered']
    #allocation3 [shape = 's32[1]{0}', space=sflag, size = 0x4, scoped, tag = 'scoped memory for tpu_custom_call.1']
    #allocation4 [shape = 's32[1]{0}', space=sflag, size = 0x4, scoped, tag = 'scoped memory for tpu_custom_call.1']
    #allocation5 [shape = 'u8[4096]{0}', space=vmem, size = 0x1000, scoped, tag = 'output window, operand 0, single buffered']
    %7 = vsyncpa [#allocation3], 0
    %8 = vsyncpa [#allocation4], 0
    // Predicated region
    $region2: #{tpu_custom_call.1} parent=1 // pred_check
      _
    $region3: #{tpu_custom_call.1} parent=1 // pred_check_branch
      %10 = sbr.rel (0) target = $region5
    $region4: #{tpu_custom_call.1} parent=1 // pred_region
      _
    $region5: #{tpu_custom_call.1} parent=1 // pred_fallthru
      _
    // Predicated region
    $region6: #{tpu_custom_call.1} parent=1 // pred_check
      _
    $region7: #{tpu_custom_call.1} parent=1 // pred_check_branch
      %12 = sbr.rel (0) target = $region9
    $region8: #{tpu_custom_call.1} parent=1 // pred_region
      %s14 = ssub.s32 1536, 1536
      %15 = vsyncadd [#allocation3], %s14
      %s16 = sshll.u32 [#allocation2], 4
      %s17 = int_to_ptr.vmem [resolvable:$true] %s16
      %22 = dma.hbm_to_vmem [thread:$0]  %s1, 1536, %s17, [#allocation3], 128, 128, 8
    $region9: #{tpu_custom_call.1} parent=1 // pred_fallthru
      _
    // Predicated region
    $region10: #{tpu_custom_call.1} parent=1 // pred_check
      _
    $region11: #{tpu_custom_call.1} parent=1 // pred_check_branch
      %24 = sbr.rel (0) target = $region13
    $region12: #{tpu_custom_call.1} parent=1 // pred_region
      %25 = dma.done [#allocation3], 1536
    $region13: #{tpu_custom_call.1} parent=1 // pred_fallthru
      _
    %v26 = vld [vmem:[%s0] sm:$0xff]
    %v27 = vlaneseq
    %v28 = vand.u32 %v27, 127
    %29 = vset.pattern.permute.xlu0 0
    %30 = vperm.xlu0 %29, %v26
    %v31 = vpop.permute.xlu0 %30
    %vm32 = vcmp.eq.s32.totalorder %v31, %v28
    %v33 = vadd.s32 %v26, 24
    %34 = vset.pattern.permute.xlu0 1
    %35 = vperm.xlu0 %34, %v33
    %v36 = vpop.permute.xlu0 %35
    %vm37 = vcmp.eq.s32.totalorder %v36, %v28
    %vm38 = vmor %vm32, %vm37
    %v39 = vadd.s32 %v26, 48
    %40 = vset.pattern.permute.xlu0 2
    %41 = vperm.xlu0 %40, %v39
    %v42 = vpop.permute.xlu0 %41
    %vm43 = vcmp.eq.s32.totalorder %v42, %v28
    %vm44 = vmor %vm38, %vm43
    %v45 = vadd.s32 %v26, 72
    %46 = vset.pattern.permute.xlu0 3
    %47 = vperm.xlu0 %46, %v45
    %v48 = vpop.permute.xlu0 %47
    %vm49 = vcmp.eq.s32.totalorder %v48, %v28
    %vm50 = vmor %vm44, %vm49
    %v51 = vsel %vm50, 1, 0
    %v52 = vcvt.s32.f32 %v51
    %v53 = vld [vmem:[#allocation2] sm:$0xff]
    %v54 = vld [vmem:[#allocation2 + $0x8] sm:$0xff]
    %v55 = vld [vmem:[#allocation2 + $0x10] sm:$0xff]
    %v56 = vld [vmem:[#allocation2 + $0x18] sm:$0xff]
    %v57 = vld [vmem:[#allocation2 + $0x20] sm:$0xff]
    %v58 = vld [vmem:[#allocation2 + $0x28] sm:$0xff]
    %v59 = vld [vmem:[#allocation2 + $0x30] sm:$0xff]
    %v60 = vld [vmem:[#allocation2 + $0x38] sm:$0xff]
    %v61 = vld [vmem:[#allocation2 + $0x40] sm:$0xff]
    %v62 = vld [vmem:[#allocation2 + $0x48] sm:$0xff]
    %v63 = vld [vmem:[#allocation2 + $0x50] sm:$0xff]
    %v64 = vld [vmem:[#allocation2 + $0x58] sm:$0xff]
    %vm65 = vcmask 785408
    %v67 = vsel %vm65, %v52, 0
    %69 = vmatprep.subr.mxu0 0.0
    %70 = vmatpush1.msra.mxu0 %v53
    %71 = vmatprep.subr.mxu0 0.0
    %72 = vmatpush1.msra.mxu0 %v54
    %73 = vmatprep.subr.mxu0 0.0
    %74 = vmatpush1.msra.mxu0 %v55
    %75 = vmatprep.subr.mxu0 0.0
    %76 = vmatpush1.msra.mxu0 %v56
    %77 = vmatprep.subr.mxu0 0.0
    %78 = vmatpush1.msra.mxu0 %v57
    %79 = vmatprep.subr.mxu0 0.0
    %80 = vmatpush1.msra.mxu0 %v58
    %81 = vmatprep.subr.mxu0 0.0
    %82 = vmatpush1.msra.mxu0 %v59
    %83 = vmatprep.subr.mxu0 0.0
    %84 = vmatpush1.msra.mxu0 %v60
    %85 = vmatprep.subr.mxu0 0.0
    %86 = vmatpush1.msra.mxu0 %v61
    %87 = vmatprep.subr.mxu0 0.0
    %88 = vmatpush1.msra.mxu0 %v62
    %89 = vmatprep.subr.mxu0 0.0
    %90 = vmatpush1.msra.mxu0 %v63
    %91 = vmatprep.subr.mxu0 0.0
    %92 = vmatpush1.msra.mxu0 %v64
    %93 = vmatprep.subr.mxu0 0.0
    %94 = vmatpush1.msra.mxu0 0.0
    %95 = vmatprep.subr.mxu0 0.0
    %96 = vmatpush1.msra.mxu0 0.0
    %97 = vmatprep.subr.mxu0 0.0
    %98 = vmatpush1.msra.mxu0 0.0
    %99 = vmatprep.subr.mxu0 0.0
    %100 = vmatpush1.msra.mxu0 0.0
    %101 = vmatprep.subr.mxu0 0.0
    %102 = vmatpush1.msra.mxu0 0.0
    %103 = vmatprep.subr.mxu0 0.0
    %104 = vmatpush1.msra.mxu0 0.0
    %105 = vmatprep.subr.mxu0 0.0
    %106 = vmatpush1.msra.mxu0 0.0
    %107 = vmatprep.subr.mxu0 0.0
    %108 = vmatpush1.msra.mxu0 0.0
    %109 = vmatprep.subr.mxu0 0.0
    %110 = vmatpush1.msra.mxu0 0.0
    %111 = vmatprep.subr.mxu0 0.0
    %112 = vmatpush1.msra.mxu0 0.0
    %113 = vmatprep.subr.mxu0 0.0
    %114 = vmatpush1.msra.mxu0 0.0
    %115 = vmatprep.subr.mxu0 0.0
    %116 = vmatpush1.msra.mxu0 0.0
    %117 = vmatprep.subr.mxu0 0.0
    %118 = vmatpush1.msra.mxu0 0.0
    %119 = vmatprep.subr.mxu0 0.0
    %120 = vmatpush1.msra.mxu0 0.0
    %121 = vmatprep.subr.mxu0 0.0
    %122 = vmatpush1.msra.mxu0 0.0
    %123 = vmatprep.subr.mxu0 0.0
    %124 = vmatpush1.msra.mxu0 0.0
    %125 = vmatprep.subr.mxu0 0.0
    %126 = vmatpush1.msra.mxu0 0.0
    %127 = vmatprep.subr.mxu0 0.0
    %128 = vmatpush1.msra.mxu0 0.0
    %129 = vmatprep.subr.mxu0 0.0
    %130 = vmatpush1.msra.mxu0 0.0
    %131 = vmatprep.subr.mxu0 0.0
    %132 = vmatpush1.msra.mxu0 0.0
    %133 = vmatprep.mubr.f32.mxu0 0.0
    %134 = vmatmul.mubr.f32.gmra.mrb[0].mxu0 %v67
    %v135 = vpop.f32.mrb[0].mxu0
    %v136 = vadd.f32 0.0, %v135
    %v137 = vpop.f32.mrb[0].mxu0
    %138 = vdwg.mxu0
    %139 = vst [vmem:[#allocation5] sm:$0xff] %v136
    // Predicated region
    $region14: #{tpu_custom_call.1} parent=1 // pred_check
      _
    $region15: #{tpu_custom_call.1} parent=1 // pred_check_branch
      %141 = sbr.rel (0) target = $region17
    $region16: #{tpu_custom_call.1} parent=1 // pred_region
      %s143 = ssub.s32 128, 128
      %144 = vsyncadd [#allocation4], %s143
      %s146 = sshll.u32 [#allocation5], 4
      %s147 = int_to_ptr.vmem [resolvable:$true] %s146
      %149 = dma.vmem_to_hbm [thread:$0]  %s147, 128, %s2, [#allocation4]
    $region17: #{tpu_custom_call.1} parent=1 // pred_fallthru
      _
    // Predicated region
    $region18: #{tpu_custom_call.1} parent=1 // pred_check
      _
    $region19: #{tpu_custom_call.1} parent=1 // pred_check_branch
      %151 = sbr.rel (0) target = $region21
    $region20: #{tpu_custom_call.1} parent=1 // pred_region
      %152 = dma.done [#allocation4], 128
    $region21: #{tpu_custom_call.1} parent=1 // pred_fallthru
      _
    %153 = vsyncpa [#allocation3], 1
    %154 = vsyncpa [#allocation4], 1

// kernel: tpu_custom_call.1
$region0: #{tpu_custom_call.1}
  #allocation0 [shape = 'u32[]', space=smem, size = 0x4, offset = 0x4, fixed_abs, tag = 'smem constant byte address 0x4 - core index']
  #allocation1 [shape = 'u32[144,128]{1,0:T(1,128)}', space=vmem, size = 0x12000, scoped, tag = 'internal scratch']
  %s0 = inlined_call_operand.vmem [shape: s32[8,4], index: 0, kind: input, shape index: {}]
  %s1 = inlined_call_operand.hbm [shape: f32[96,128], index: 1, kind: input, shape index: {}]
  %s2 = inlined_call_operand.hbm [shape: f32[8,128], index: 2, kind: output, shape index: {}]
  %s3 = sld [smem:[#allocation0]]
  $region22: #{tpu_custom_call.1} parent=0
    _
  %s5 = ssub.s32 1, %s3
  %s6 = scalar_select 0, %s5, %s3
  $region1: #{tpu_custom_call.1} parent=0
    #allocation2 [shape = 'u8[49152]{0}', space=vmem, size = 0xc000, scoped, tag = 'input window, operand 1, single buffered']
    #allocation3 [shape = 's32[1]{0}', space=sflag, size = 0x4, scoped, tag = 'scoped memory for tpu_custom_call.1']
    #allocation4 [shape = 's32[1]{0}', space=sflag, size = 0x4, scoped, tag = 'scoped memory for tpu_custom_call.1']
    #allocation5 [shape = 'u8[4096]{0}', space=vmem, size = 0x1000, scoped, tag = 'output window, operand 0, single buffered']
    %7 = vsyncpa [#allocation3], 0
    %8 = vsyncpa [#allocation4], 0
    // Predicated region
    $region2: #{tpu_custom_call.1} parent=1 // pred_check
      _
    $region3: #{tpu_custom_call.1} parent=1 // pred_check_branch
      %10 = sbr.rel (0) target = $region5
    $region4: #{tpu_custom_call.1} parent=1 // pred_region
      _
    $region5: #{tpu_custom_call.1} parent=1 // pred_fallthru
      _
    // Predicated region
    $region6: #{tpu_custom_call.1} parent=1 // pred_check
      _
    $region7: #{tpu_custom_call.1} parent=1 // pred_check_branch
      %12 = sbr.rel (0) target = $region9
    $region8: #{tpu_custom_call.1} parent=1 // pred_region
      %s14 = ssub.s32 1536, 1536
      %15 = vsyncadd [#allocation3], %s14
      %s16 = sshll.u32 [#allocation2], 4
      %s17 = int_to_ptr.vmem [resolvable:$true] %s16
      %22 = dma.hbm_to_vmem [thread:$0]  %s1, 1536, %s17, [#allocation3], 128, 128, 8
    $region9: #{tpu_custom_call.1} parent=1 // pred_fallthru
      _
    // Predicated region
    $region10: #{tpu_custom_call.1} parent=1 // pred_check
      _
    $region11: #{tpu_custom_call.1} parent=1 // pred_check_branch
      %24 = sbr.rel (0) target = $region13
    $region12: #{tpu_custom_call.1} parent=1 // pred_region
      %25 = dma.done [#allocation3], 1536
    $region13: #{tpu_custom_call.1} parent=1 // pred_fallthru
      _
    %v26 = vld [vmem:[%s0] sm:$0xff]
    %v27 = vlaneseq
    %v28 = vand.u32 %v27, 127
    %29 = vset.pattern.permute.xlu0 0
    %30 = vperm.xlu0 %29, %v26
    %v31 = vpop.permute.xlu0 %30
    %vm32 = vcmp.eq.s32.totalorder %v31, %v28
    %v33 = vadd.s32 %v26, 24
    %34 = vset.pattern.permute.xlu0 1
    %35 = vperm.xlu0 %34, %v33
    %v36 = vpop.permute.xlu0 %35
    %vm37 = vcmp.eq.s32.totalorder %v36, %v28
    %vm38 = vmor %vm32, %vm37
    %v39 = vadd.s32 %v26, 48
    %40 = vset.pattern.permute.xlu0 2
    %41 = vperm.xlu0 %40, %v39
    %v42 = vpop.permute.xlu0 %41
    %vm43 = vcmp.eq.s32.totalorder %v42, %v28
    %vm44 = vmor %vm38, %vm43
    %v45 = vadd.s32 %v26, 72
    %46 = vset.pattern.permute.xlu0 3
    %47 = vperm.xlu0 %46, %v45
    %v48 = vpop.permute.xlu0 %47
    %vm49 = vcmp.eq.s32.totalorder %v48, %v28
    %vm50 = vmor %vm44, %vm49
    %v51 = vsel %vm50, 1, 0
    %v52 = vcvt.s32.f32 %v51
    %v53 = vld [vmem:[#allocation2] sm:$0xff]
    %v54 = vld [vmem:[#allocation2 + $0x8] sm:$0xff]
    %v55 = vld [vmem:[#allocation2 + $0x10] sm:$0xff]
    %v56 = vld [vmem:[#allocation2 + $0x18] sm:$0xff]
    %v57 = vld [vmem:[#allocation2 + $0x20] sm:$0xff]
    %v58 = vld [vmem:[#allocation2 + $0x28] sm:$0xff]
    %v59 = vld [vmem:[#allocation2 + $0x30] sm:$0xff]
    %v60 = vld [vmem:[#allocation2 + $0x38] sm:$0xff]
    %v61 = vld [vmem:[#allocation2 + $0x40] sm:$0xff]
    %v62 = vld [vmem:[#allocation2 + $0x48] sm:$0xff]
    %v63 = vld [vmem:[#allocation2 + $0x50] sm:$0xff]
    %v64 = vld [vmem:[#allocation2 + $0x58] sm:$0xff]
    %vm65 = vcmask 785408
    %v67 = vsel %vm65, %v52, 0
    %69 = vmatprep.subr.mxu0 0.0
    %70 = vmatpush1.msra.mxu0 %v53
    %71 = vmatprep.subr.mxu0 0.0
    %72 = vmatpush1.msra.mxu0 %v54
    %73 = vmatprep.subr.mxu0 0.0
    %74 = vmatpush1.msra.mxu0 %v55
    %75 = vmatprep.subr.mxu0 0.0
    %76 = vmatpush1.msra.mxu0 %v56
    %77 = vmatprep.subr.mxu0 0.0
    %78 = vmatpush1.msra.mxu0 %v57
    %79 = vmatprep.subr.mxu0 0.0
    %80 = vmatpush1.msra.mxu0 %v58
    %81 = vmatprep.subr.mxu0 0.0
    %82 = vmatpush1.msra.mxu0 %v59
    %83 = vmatprep.subr.mxu0 0.0
    %84 = vmatpush1.msra.mxu0 %v60
    %85 = vmatprep.subr.mxu0 0.0
    %86 = vmatpush1.msra.mxu0 %v61
    %87 = vmatprep.subr.mxu0 0.0
    %88 = vmatpush1.msra.mxu0 %v62
    %89 = vmatprep.subr.mxu0 0.0
    %90 = vmatpush1.msra.mxu0 %v63
    %91 = vmatprep.subr.mxu0 0.0
    %92 = vmatpush1.msra.mxu0 %v64
    %93 = vmatprep.subr.mxu0 0.0
    %94 = vmatpush1.msra.mxu0 0.0
    %95 = vmatprep.subr.mxu0 0.0
    %96 = vmatpush1.msra.mxu0 0.0
    %97 = vmatprep.subr.mxu0 0.0
    %98 = vmatpush1.msra.mxu0 0.0
    %99 = vmatprep.subr.mxu0 0.0
    %100 = vmatpush1.msra.mxu0 0.0
    %101 = vmatprep.subr.mxu0 0.0
    %102 = vmatpush1.msra.mxu0 0.0
    %103 = vmatprep.subr.mxu0 0.0
    %104 = vmatpush1.msra.mxu0 0.0
    %105 = vmatprep.subr.mxu0 0.0
    %106 = vmatpush1.msra.mxu0 0.0
    %107 = vmatprep.subr.mxu0 0.0
    %108 = vmatpush1.msra.mxu0 0.0
    %109 = vmatprep.subr.mxu0 0.0
    %110 = vmatpush1.msra.mxu0 0.0
    %111 = vmatprep.subr.mxu0 0.0
    %112 = vmatpush1.msra.mxu0 0.0
    %113 = vmatprep.subr.mxu0 0.0
    %114 = vmatpush1.msra.mxu0 0.0
    %115 = vmatprep.subr.mxu0 0.0
    %116 = vmatpush1.msra.mxu0 0.0
    %117 = vmatprep.subr.mxu0 0.0
    %118 = vmatpush1.msra.mxu0 0.0
    %119 = vmatprep.subr.mxu0 0.0
    %120 = vmatpush1.msra.mxu0 0.0
    %121 = vmatprep.subr.mxu0 0.0
    %122 = vmatpush1.msra.mxu0 0.0
    %123 = vmatprep.subr.mxu0 0.0
    %124 = vmatpush1.msra.mxu0 0.0
    %125 = vmatprep.subr.mxu0 0.0
    %126 = vmatpush1.msra.mxu0 0.0
    %127 = vmatprep.subr.mxu0 0.0
    %128 = vmatpush1.msra.mxu0 0.0
    %129 = vmatprep.subr.mxu0 0.0
    %130 = vmatpush1.msra.mxu0 0.0
    %131 = vmatprep.subr.mxu0 0.0
    %132 = vmatpush1.msra.mxu0 0.0
    %133 = vmatprep.mubr.f32.mxu0 0.0
    %134 = vmatmul.mubr.f32.gmra.mrb[0].mxu0 %v67
    %v135 = vpop.f32.mrb[0].mxu0
    %v136 = vadd.f32 0.0, %v135
    %v137 = vpop.f32.mrb[0].mxu0
    %138 = vdwg.mxu0
    %139 = vst [vmem:[#allocation5] sm:$0xff] %v136
    // Predicated region
    $region14: #{tpu_custom_call.1} parent=1 // pred_check
      _
    $region15: #{tpu_custom_call.1} parent=1 // pred_check_branch
      %141 = sbr.rel (0) target = $region17
    $region16: #{tpu_custom_call.1} parent=1 // pred_region
      %s143 = ssub.s32 128, 128
      %144 = vsyncadd [#allocation4], %s143
      %s146 = sshll.u32 [#allocation5], 4
      %s147 = int_to_ptr.vmem [resolvable:$true] %s146
      %149 = dma.vmem_to_hbm [thread:$0]  %s147, 128, %s2, [#allocation4]
    $region17: #{tpu_custom_call.1} parent=1 // pred_fallthru
      _
    // Predicated region
    $region18: #{tpu_custom_call.1} parent=1 // pred_check
      _
    $region19: #{tpu_custom_call.1} parent=1 // pred_check_branch
      %151 = sbr.rel (0) target = $region21
    $region20: #{tpu_custom_call.1} parent=1 // pred_region
      %152 = dma.done [#allocation4], 128
    $region21: #{tpu_custom_call.1} parent=1 // pred_fallthru
      _
    %153 = vsyncpa [#allocation3], 1
    %154 = vsyncpa [#allocation4], 1

</llo_original>
